<compile_context>
chip_gen: v7x
topology: tpu7x:2x2x1
jax: 0.10.0
libtpu: 0.0.40
codegen_flags: <defaults>
</compile_context>

<pallas_src>
import jax
import jax.numpy as jnp
from jax.experimental import pallas as pl
from jax.experimental.pallas import tpu as pltpu


def _segment_classifier_kernel(w_ref, b_ref, x_ref, o_ref):
    # w_ref: (C, C) f32 in SMEM, b_ref: (C,) f32 in SMEM
    # x_ref / o_ref: (NB, C, RB, LC) blocks in VMEM.  The channel axis is a leading
    # "page" dim, so every per-channel slab below is a dense (NB, RB, LC) value.
    c = w_ref.shape[0]

    xs = [x_ref[:, ci, :, :].astype(jnp.float32) for ci in range(c)]  # C dense slabs

    # Conv1d(kernel_size=1): y[o] = sum_ci W[o, ci] * x[ci] + b[o]
    # Unrolled scalar-broadcast multiply-adds on the VPU (weights are SMEM scalars).
    rows = []
    for o in range(c):
        acc = xs[0] * w_ref[o, 0]
        for ci in range(1, c):
            acc = acc + xs[ci] * w_ref[o, ci]
        rows.append(acc + b_ref[o])                    # (NB, RB, LC), dense

    # Numerically-stable softmax over the channel axis (held as C dense slabs).
    m = rows[0]
    for o in range(1, c):
        m = jnp.maximum(m, rows[o])
    es = [jnp.exp(r - m) for r in rows]
    denom = es[0]
    for o in range(1, c):
        denom = denom + es[o]
    inv = pl.reciprocal(denom, approx=False)           # exact; EUP has headroom here

    # Dense per-channel page-slice stores (no sublane masking: channel is a page dim).
    for o in range(c):
        o_ref[:, o, :, :] = (es[o] * inv).astype(o_ref.dtype)


def segment_classifier_forward(x, weight, bias, *,
                               target_block_bytes=2 * 1024 * 1024,
                               max_lane_width=512):
    """x: (N, C, L); weight: (C, C, 1) (PyTorch Conv1d layout) or (C, C); bias: (C,)."""
    n, c, length = x.shape
    w2d = (weight[:, :, 0] if weight.ndim == 3 else weight).astype(jnp.float32)  # (C_out, C_in)
    b1d = bias.reshape(c).astype(jnp.float32)
    itemsize = jnp.dtype(x.dtype).itemsize

    # --- Split L = R * LC (free reshape; per-(n,c) rows stay contiguous in HBM). ---
    # LC: largest power-of-two multiple of 128 dividing L (capped), so lanes are dense
    # and R gets enough rows to fill the sublane axis.
    if length % 128 == 0:
        lc = 128
        while lc * 2 <= max_lane_width and length % (lc * 2) == 0:
            lc *= 2
    else:
        # TODO(synk): non-128-multiple L falls back to a single lane chunk (masked
        # lane stores, perf-only); fine for typical ECG lengths which are 128-aligned.
        lc = length
    r = length // lc

    # --- Rows (sublane) and batch (page) tiling under the ~2 MiB/input-block budget. ---
    elems_budget = max(1, target_block_bytes // (c * itemsize))   # nb * rb * lc elements
    rows_budget = max(1, elems_budget // lc)
    if r <= rows_budget:
        rb = r                                        # full R: always layout-legal
    else:
        rb = max(8, (rows_budget // 8) * 8)           # multiple of 8 -> dense sublanes
    nb = int(max(1, min(n, rows_budget // max(rb, 1))))

    grid = (pl.cdiv(n, nb), pl.cdiv(r, rb))
    xr = x.reshape(n, c, r, lc)

    # Memory-bound op: 2 * bytes, ~10 VPU flops + 1 exp per output element.
    total = n * c * length
    cost = pl.CostEstimate(flops=10 * total,
                           transcendentals=total,
                           bytes_accessed=2 * total * itemsize)

    out = pl.pallas_call(
        _segment_classifier_kernel,
        out_shape=jax.ShapeDtypeStruct((n, c, r, lc), x.dtype),
        grid_spec=pltpu.PrefetchScalarGridSpec(
            num_scalar_prefetch=0,
            grid=grid,
            in_specs=[
                pl.BlockSpec(memory_space=pltpu.MemorySpace.SMEM),      # weight (C, C)
                pl.BlockSpec(memory_space=pltpu.MemorySpace.SMEM),      # bias (C,)
                pl.BlockSpec((nb, c, rb, lc), lambda i, j: (i, 0, j, 0)),
            ],
            out_specs=pl.BlockSpec((nb, c, rb, lc), lambda i, j: (i, 0, j, 0)),
        ),
        compiler_params=pltpu.CompilerParams(
            dimension_semantics=("parallel", "parallel"),
            vmem_limit_bytes=32 * 1024 * 1024,   # covers v5e's smaller default scoped VMEM
        ),
        cost_estimate=cost,
    )(w2d, b1d, xr)

    return out.reshape(n, c, length)


def _init_params(num_classes=4, key=jax.random.PRNGKey(42)):
    # Matches nn.init.xavier_uniform_ on a Conv1d weight of shape (C, C, 1).
    fan_in = num_classes * 1
    fan_out = num_classes * 1
    bound = (6.0 / (fan_in + fan_out)) ** 0.5
    weight = jax.random.uniform(key, (num_classes, num_classes, 1),
                                minval=-bound, maxval=bound, dtype=jnp.float32)
    bias = jnp.zeros((num_classes,), dtype=jnp.float32)
    return weight, bias


if __name__ == "__main__":
    num_classes = 4
    batch = 2
    length = 4096   # small, 128-aligned sequence length (exercises the dense-row path)

    key = jax.random.PRNGKey(0)
    kx, kw = jax.random.split(key)
    x = jax.random.normal(kx, (batch, num_classes, length), dtype=jnp.float32)
    weight, bias = _init_params(num_classes, key=kw)

    out = jax.block_until_ready(segment_classifier_forward(x, weight, bias))

    # Pure-JAX reference: Conv1d(k=1) channel mix + softmax over channel dim.
    ref = jnp.einsum("oc,ncl->nol", weight[:, :, 0], x) + bias[None, :, None]
    ref = jax.nn.softmax(ref, axis=1)

    assert out.shape == (batch, num_classes, length)
    assert jnp.allclose(out, ref, atol=1e-5, rtol=1e-5), float(jnp.max(jnp.abs(out - ref)))
    print("KERNEL_OK")
</pallas_src>

<mosaic_0001>
module attributes {stable_mosaic.version = 11 : i64} {
  func.func @_segment_classifier_kernel(%arg0: i32, %arg1: i32, %arg2: memref<4x4xf32, #tpu.memory_space<smem>>, %arg3: memref<4xf32, #tpu.memory_space<smem>>, %arg4: memref<2x4x8x512xf32, #tpu.memory_space<vmem>>, %arg5: memref<2x4x8x512xf32, #tpu.memory_space<vmem>>) attributes {dimension_semantics = [#tpu.dimension_semantics<parallel>, #tpu.dimension_semantics<parallel>], iteration_bounds = array<i64: 1, 1>, scalar_prefetch = 0 : i64, scratch_operands = 0 : i64, tpu.core_type = #tpu.core_type<tc>, window_params = [{transform_indices = @transform_0, window_bounds = array<i64: 4, 4>}, {transform_indices = @transform_1, window_bounds = array<i64: 4>}, {transform_indices = @transform_2, window_bounds = array<i64: 2, 4, 8, 512>}, {transform_indices = @transform_3, window_bounds = array<i64: 2, 4, 8, 512>}]} {
    %c0 = arith.constant 0 : index
    %c0_0 = arith.constant 0 : index
    %c0_1 = arith.constant 0 : index
    %c0_2 = arith.constant 0 : index
    %0 = vector.load %arg4[%c0, %c0_0, %c0_1, %c0_2] : memref<2x4x8x512xf32, #tpu.memory_space<vmem>>, vector<2x1x8x512xf32>
    %1 = vector.shape_cast %0 : vector<2x1x8x512xf32> to vector<2x8x512xf32>
    %c0_3 = arith.constant 0 : index
    %c1 = arith.constant 1 : index
    %c0_4 = arith.constant 0 : index
    %c0_5 = arith.constant 0 : index
    %2 = vector.load %arg4[%c0_3, %c1, %c0_4, %c0_5] : memref<2x4x8x512xf32, #tpu.memory_space<vmem>>, vector<2x1x8x512xf32>
    %3 = vector.shape_cast %2 : vector<2x1x8x512xf32> to vector<2x8x512xf32>
    %c0_6 = arith.constant 0 : index
    %c2 = arith.constant 2 : index
    %c0_7 = arith.constant 0 : index
    %c0_8 = arith.constant 0 : index
    %4 = vector.load %arg4[%c0_6, %c2, %c0_7, %c0_8] : memref<2x4x8x512xf32, #tpu.memory_space<vmem>>, vector<2x1x8x512xf32>
    %5 = vector.shape_cast %4 : vector<2x1x8x512xf32> to vector<2x8x512xf32>
    %c0_9 = arith.constant 0 : index
    %c3 = arith.constant 3 : index
    %c0_10 = arith.constant 0 : index
    %c0_11 = arith.constant 0 : index
    %6 = vector.load %arg4[%c0_9, %c3, %c0_10, %c0_11] : memref<2x4x8x512xf32, #tpu.memory_space<vmem>>, vector<2x1x8x512xf32>
    %7 = vector.shape_cast %6 : vector<2x1x8x512xf32> to vector<2x8x512xf32>
    %c0_12 = arith.constant 0 : index
    %c0_13 = arith.constant 0 : index
    %8 = memref.load %arg2[%c0_12, %c0_13] : memref<4x4xf32, #tpu.memory_space<smem>>
    %9 = vector.broadcast %8 : f32 to vector<2x8x512xf32>
    %10 = arith.mulf %1, %9 : vector<2x8x512xf32>
    %c0_14 = arith.constant 0 : index
    %c1_15 = arith.constant 1 : index
    %11 = memref.load %arg2[%c0_14, %c1_15] : memref<4x4xf32, #tpu.memory_space<smem>>
    %12 = vector.broadcast %11 : f32 to vector<2x8x512xf32>
    %13 = arith.mulf %3, %12 : vector<2x8x512xf32>
    %14 = arith.addf %10, %13 : vector<2x8x512xf32>
    %c0_16 = arith.constant 0 : index
    %c2_17 = arith.constant 2 : index
    %15 = memref.load %arg2[%c0_16, %c2_17] : memref<4x4xf32, #tpu.memory_space<smem>>
    %16 = vector.broadcast %15 : f32 to vector<2x8x512xf32>
    %17 = arith.mulf %5, %16 : vector<2x8x512xf32>
    %18 = arith.addf %14, %17 : vector<2x8x512xf32>
    %c0_18 = arith.constant 0 : index
    %c3_19 = arith.constant 3 : index
    %19 = memref.load %arg2[%c0_18, %c3_19] : memref<4x4xf32, #tpu.memory_space<smem>>
    %20 = vector.broadcast %19 : f32 to vector<2x8x512xf32>
    %21 = arith.mulf %7, %20 : vector<2x8x512xf32>
    %22 = arith.addf %18, %21 : vector<2x8x512xf32>
    %c0_20 = arith.constant 0 : index
    %23 = memref.load %arg3[%c0_20] : memref<4xf32, #tpu.memory_space<smem>>
    %24 = vector.broadcast %23 : f32 to vector<2x8x512xf32>
    %25 = arith.addf %22, %24 : vector<2x8x512xf32>
    %c1_21 = arith.constant 1 : index
    %c0_22 = arith.constant 0 : index
    %26 = memref.load %arg2[%c1_21, %c0_22] : memref<4x4xf32, #tpu.memory_space<smem>>
    %27 = vector.broadcast %26 : f32 to vector<2x8x512xf32>
    %28 = arith.mulf %1, %27 : vector<2x8x512xf32>
    %c1_23 = arith.constant 1 : index
    %c1_24 = arith.constant 1 : index
    %29 = memref.load %arg2[%c1_23, %c1_24] : memref<4x4xf32, #tpu.memory_space<smem>>
    %30 = vector.broadcast %29 : f32 to vector<2x8x512xf32>
    %31 = arith.mulf %3, %30 : vector<2x8x512xf32>
    %32 = arith.addf %28, %31 : vector<2x8x512xf32>
    %c1_25 = arith.constant 1 : index
    %c2_26 = arith.constant 2 : index
    %33 = memref.load %arg2[%c1_25, %c2_26] : memref<4x4xf32, #tpu.memory_space<smem>>
    %34 = vector.broadcast %33 : f32 to vector<2x8x512xf32>
    %35 = arith.mulf %5, %34 : vector<2x8x512xf32>
    %36 = arith.addf %32, %35 : vector<2x8x512xf32>
    %c1_27 = arith.constant 1 : index
    %c3_28 = arith.constant 3 : index
    %37 = memref.load %arg2[%c1_27, %c3_28] : memref<4x4xf32, #tpu.memory_space<smem>>
    %38 = vector.broadcast %37 : f32 to vector<2x8x512xf32>
    %39 = arith.mulf %7, %38 : vector<2x8x512xf32>
    %40 = arith.addf %36, %39 : vector<2x8x512xf32>
    %c1_29 = arith.constant 1 : index
    %41 = memref.load %arg3[%c1_29] : memref<4xf32, #tpu.memory_space<smem>>
    %42 = vector.broadcast %41 : f32 to vector<2x8x512xf32>
    %43 = arith.addf %40, %42 : vector<2x8x512xf32>
    %c2_30 = arith.constant 2 : index
    %c0_31 = arith.constant 0 : index
    %44 = memref.load %arg2[%c2_30, %c0_31] : memref<4x4xf32, #tpu.memory_space<smem>>
    %45 = vector.broadcast %44 : f32 to vector<2x8x512xf32>
    %46 = arith.mulf %1, %45 : vector<2x8x512xf32>
    %c2_32 = arith.constant 2 : index
    %c1_33 = arith.constant 1 : index
    %47 = memref.load %arg2[%c2_32, %c1_33] : memref<4x4xf32, #tpu.memory_space<smem>>
    %48 = vector.broadcast %47 : f32 to vector<2x8x512xf32>
    %49 = arith.mulf %3, %48 : vector<2x8x512xf32>
    %50 = arith.addf %46, %49 : vector<2x8x512xf32>
    %c2_34 = arith.constant 2 : index
    %c2_35 = arith.constant 2 : index
    %51 = memref.load %arg2[%c2_34, %c2_35] : memref<4x4xf32, #tpu.memory_space<smem>>
    %52 = vector.broadcast %51 : f32 to vector<2x8x512xf32>
    %53 = arith.mulf %5, %52 : vector<2x8x512xf32>
    %54 = arith.addf %50, %53 : vector<2x8x512xf32>
    %c2_36 = arith.constant 2 : index
    %c3_37 = arith.constant 3 : index
    %55 = memref.load %arg2[%c2_36, %c3_37] : memref<4x4xf32, #tpu.memory_space<smem>>
    %56 = vector.broadcast %55 : f32 to vector<2x8x512xf32>
    %57 = arith.mulf %7, %56 : vector<2x8x512xf32>
    %58 = arith.addf %54, %57 : vector<2x8x512xf32>
    %c2_38 = arith.constant 2 : index
    %59 = memref.load %arg3[%c2_38] : memref<4xf32, #tpu.memory_space<smem>>
    %60 = vector.broadcast %59 : f32 to vector<2x8x512xf32>
    %61 = arith.addf %58, %60 : vector<2x8x512xf32>
    %c3_39 = arith.constant 3 : index
    %c0_40 = arith.constant 0 : index
    %62 = memref.load %arg2[%c3_39, %c0_40] : memref<4x4xf32, #tpu.memory_space<smem>>
    %63 = vector.broadcast %62 : f32 to vector<2x8x512xf32>
    %64 = arith.mulf %1, %63 : vector<2x8x512xf32>
    %c3_41 = arith.constant 3 : index
    %c1_42 = arith.constant 1 : index
    %65 = memref.load %arg2[%c3_41, %c1_42] : memref<4x4xf32, #tpu.memory_space<smem>>
    %66 = vector.broadcast %65 : f32 to vector<2x8x512xf32>
    %67 = arith.mulf %3, %66 : vector<2x8x512xf32>
    %68 = arith.addf %64, %67 : vector<2x8x512xf32>
    %c3_43 = arith.constant 3 : index
    %c2_44 = arith.constant 2 : index
    %69 = memref.load %arg2[%c3_43, %c2_44] : memref<4x4xf32, #tpu.memory_space<smem>>
    %70 = vector.broadcast %69 : f32 to vector<2x8x512xf32>
    %71 = arith.mulf %5, %70 : vector<2x8x512xf32>
    %72 = arith.addf %68, %71 : vector<2x8x512xf32>
    %c3_45 = arith.constant 3 : index
    %c3_46 = arith.constant 3 : index
    %73 = memref.load %arg2[%c3_45, %c3_46] : memref<4x4xf32, #tpu.memory_space<smem>>
    %74 = vector.broadcast %73 : f32 to vector<2x8x512xf32>
    %75 = arith.mulf %7, %74 : vector<2x8x512xf32>
    %76 = arith.addf %72, %75 : vector<2x8x512xf32>
    %c3_47 = arith.constant 3 : index
    %77 = memref.load %arg3[%c3_47] : memref<4xf32, #tpu.memory_space<smem>>
    %78 = vector.broadcast %77 : f32 to vector<2x8x512xf32>
    %79 = arith.addf %76, %78 : vector<2x8x512xf32>
    %80 = arith.maximumf %25, %43 : vector<2x8x512xf32>
    %81 = arith.maximumf %80, %61 : vector<2x8x512xf32>
    %82 = arith.maximumf %81, %79 : vector<2x8x512xf32>
    %83 = arith.subf %25, %82 : vector<2x8x512xf32>
    %84 = math.exp %83 : vector<2x8x512xf32>
    %85 = arith.subf %43, %82 : vector<2x8x512xf32>
    %86 = math.exp %85 : vector<2x8x512xf32>
    %87 = arith.subf %61, %82 : vector<2x8x512xf32>
    %88 = math.exp %87 : vector<2x8x512xf32>
    %89 = arith.subf %79, %82 : vector<2x8x512xf32>
    %90 = math.exp %89 : vector<2x8x512xf32>
    %91 = arith.addf %84, %86 : vector<2x8x512xf32>
    %92 = arith.addf %91, %88 : vector<2x8x512xf32>
    %93 = arith.addf %92, %90 : vector<2x8x512xf32>
    %94 = tpu.reciprocal %93 : vector<2x8x512xf32> -> vector<2x8x512xf32>
    %95 = arith.mulf %84, %94 : vector<2x8x512xf32>
    %c0_48 = arith.constant 0 : index
    %c0_49 = arith.constant 0 : index
    %c0_50 = arith.constant 0 : index
    %c0_51 = arith.constant 0 : index
    %96 = vector.load %arg5[%c0_48, %c0_49, %c0_50, %c0_51] : memref<2x4x8x512xf32, #tpu.memory_space<vmem>>, vector<2x1x8x512xf32>
    %97 = vector.shape_cast %96 : vector<2x1x8x512xf32> to vector<2x8x512xf32>
    %98 = vector.shape_cast %95 : vector<2x8x512xf32> to vector<2x1x8x512xf32>
    tpu.vector_store %arg5[%c0_48, %c0_49, %c0_50, %c0_51], %98 {strides = array<i32>} : memref<2x4x8x512xf32, #tpu.memory_space<vmem>>, vector<2x1x8x512xf32>,
    %99 = arith.mulf %86, %94 : vector<2x8x512xf32>
    %c0_52 = arith.constant 0 : index
    %c1_53 = arith.constant 1 : index
    %c0_54 = arith.constant 0 : index
    %c0_55 = arith.constant 0 : index
    %100 = vector.load %arg5[%c0_52, %c1_53, %c0_54, %c0_55] : memref<2x4x8x512xf32, #tpu.memory_space<vmem>>, vector<2x1x8x512xf32>
    %101 = vector.shape_cast %100 : vector<2x1x8x512xf32> to vector<2x8x512xf32>
    %102 = vector.shape_cast %99 : vector<2x8x512xf32> to vector<2x1x8x512xf32>
    tpu.vector_store %arg5[%c0_52, %c1_53, %c0_54, %c0_55], %102 {strides = array<i32>} : memref<2x4x8x512xf32, #tpu.memory_space<vmem>>, vector<2x1x8x512xf32>,
    %103 = arith.mulf %88, %94 : vector<2x8x512xf32>
    %c0_56 = arith.constant 0 : index
    %c2_57 = arith.constant 2 : index
    %c0_58 = arith.constant 0 : index
    %c0_59 = arith.constant 0 : index
    %104 = vector.load %arg5[%c0_56, %c2_57, %c0_58, %c0_59] : memref<2x4x8x512xf32, #tpu.memory_space<vmem>>, vector<2x1x8x512xf32>
    %105 = vector.shape_cast %104 : vector<2x1x8x512xf32> to vector<2x8x512xf32>
    %106 = vector.shape_cast %103 : vector<2x8x512xf32> to vector<2x1x8x512xf32>
    tpu.vector_store %arg5[%c0_56, %c2_57, %c0_58, %c0_59], %106 {strides = array<i32>} : memref<2x4x8x512xf32, #tpu.memory_space<vmem>>, vector<2x1x8x512xf32>,
    %107 = arith.mulf %90, %94 : vector<2x8x512xf32>
    %c0_60 = arith.constant 0 : index
    %c3_61 = arith.constant 3 : index
    %c0_62 = arith.constant 0 : index
    %c0_63 = arith.constant 0 : index
    %108 = vector.load %arg5[%c0_60, %c3_61, %c0_62, %c0_63] : memref<2x4x8x512xf32, #tpu.memory_space<vmem>>, vector<2x1x8x512xf32>
    %109 = vector.shape_cast %108 : vector<2x1x8x512xf32> to vector<2x8x512xf32>
    %110 = vector.shape_cast %107 : vector<2x8x512xf32> to vector<2x1x8x512xf32>
    tpu.vector_store %arg5[%c0_60, %c3_61, %c0_62, %c0_63], %110 {strides = array<i32>} : memref<2x4x8x512xf32, #tpu.memory_space<vmem>>, vector<2x1x8x512xf32>,
    return
  }
  func.func @transform_0(%arg0: i32, %arg1: i32) -> (i32, i32) {
    %c0_i32 = arith.constant 0 : i32
    %c0_i32_0 = arith.constant 0 : i32
    %c0_i32_1 = arith.constant 0 : i32
    return %c0_i32, %c0_i32_0 : i32, i32
  }
  func.func @transform_1(%arg0: i32, %arg1: i32) -> i32 {
    %c0_i32 = arith.constant 0 : i32
    %c0_i32_0 = arith.constant 0 : i32
    return %c0_i32 : i32
  }
  func.func @transform_2(%arg0: i32, %arg1: i32) -> (i32, i32, i32, i32) {
    %c0_i32 = arith.constant 0 : i32
    %c0_i32_0 = arith.constant 0 : i32
    %c0_i32_1 = arith.constant 0 : i32
    return %arg0, %c0_i32, %arg1, %c0_i32_0 : i32, i32, i32, i32
  }
  func.func @transform_3(%arg0: i32, %arg1: i32) -> (i32, i32, i32, i32) {
    %c0_i32 = arith.constant 0 : i32
    %c0_i32_0 = arith.constant 0 : i32
    %c0_i32_1 = arith.constant 0 : i32
    return %arg0, %c0_i32, %arg1, %c0_i32_0 : i32, i32, i32, i32
  }
}

</mosaic_0001>

<llo_original>
// kernel: tpu_custom_call.1
$region0: #{tpu_custom_call.1}
  #allocation0 [shape = 'u32[]', space=smem, size = 0x4, offset = 0x4, fixed_abs, tag = 'smem constant byte address 0x4 - core index']
  #allocation1 [shape = 'u32[144,128]{1,0:T(1,128)}', space=vmem, size = 0x12000, scoped, tag = 'internal scratch']
  %s0 = inlined_call_operand.hbm [shape: f32[4,4], index: 0, kind: input, shape index: {}]
  %s1 = inlined_call_operand.vmem [shape: f32[4], index: 1, kind: input, shape index: {}]
  %s2 = inlined_call_operand.hbm [shape: f32[2,4,8,512], index: 2, kind: input, shape index: {}]
  %s3 = inlined_call_operand.hbm [shape: f32[2,4,8,512], index: 3, kind: output, shape index: {}]
  %s4 = sld [smem:[#allocation0]]
  $region34: #{tpu_custom_call.1} parent=0
    _
  %s6 = ssub.s32 1, %s4
  %s7 = scalar_select 0, %s6, %s4
  $region1: #{tpu_custom_call.1} parent=0
    #allocation2 [shape = 'u8[2048]{0}', space=smem, size = 0x800, scoped, tag = 'input window, operand 0, single buffered']
    #allocation3 [shape = 's32[1]{0}', space=sflag, size = 0x4, scoped, tag = 'scoped memory for tpu_custom_call.1']
    #allocation4 [shape = 's32[1]{0}', space=sflag, size = 0x4, scoped, tag = 'scoped memory for tpu_custom_call.1']
    #allocation5 [shape = 's32[1]{0}', space=sflag, size = 0x4, scoped, tag = 'scoped memory for tpu_custom_call.1']
    #allocation6 [shape = 's32[1]{0}', space=sflag, size = 0x4, scoped, tag = 'scoped memory for tpu_custom_call.1']
    #allocation7 [shape = 'u8[512]{0}', space=smem, size = 0x200, scoped, tag = 'input window, operand 1, single buffered']
    #allocation8 [shape = 'u8[131072]{0}', space=vmem, size = 0x20000, scoped, tag = 'input window, operand 2, single buffered']
    #allocation9 [shape = 'u8[131072]{0}', space=vmem, size = 0x20000, scoped, tag = 'output window, operand 0, single buffered']
    %8 = vsyncpa [#allocation5], 0
    %9 = vsyncpa [#allocation6], 0
    %10 = vsyncpa [#allocation3], 0
    %11 = vsyncpa [#allocation4], 0
    // Predicated region
    $region2: #{tpu_custom_call.1} parent=1 // pred_check
      _
    $region3: #{tpu_custom_call.1} parent=1 // pred_check_branch
      %13 = sbr.rel (0) target = $region5
    $region4: #{tpu_custom_call.1} parent=1 // pred_region
      %s15 = ssub.s32 64, 64
      %16 = vsyncadd [#allocation5], %s15
      %19 = dma.hbm_to_smem %s0, 64, [#allocation2], [#allocation5]
    $region5: #{tpu_custom_call.1} parent=1 // pred_fallthru
      _
    // Predicated region
    $region6: #{tpu_custom_call.1} parent=1 // pred_check
      _
    $region7: #{tpu_custom_call.1} parent=1 // pred_check_branch
      %21 = sbr.rel (0) target = $region9
    $region8: #{tpu_custom_call.1} parent=1 // pred_region
      %s23 = ssub.s32 16, 16
      %24 = vsyncadd [#allocation6], %s23
      %s26 = sshll.u32 %s1, 4
      %s27 = int_to_ptr.vmem [resolvable:$true] %s26
      %29 = dma.vmem_to_smem %s27, 16, [#allocation7], [#allocation6]
    $region9: #{tpu_custom_call.1} parent=1 // pred_fallthru
      _
    // Predicated region
    $region10: #{tpu_custom_call.1} parent=1 // pred_check
      _
    $region11: #{tpu_custom_call.1} parent=1 // pred_check_branch
      %31 = sbr.rel (0) target = $region13
    $region12: #{tpu_custom_call.1} parent=1 // pred_region
      %s33 = ssub.s32 4096, 4096
      %34 = vsyncadd [#allocation3], %s33
      %s35 = sshll.u32 [#allocation8], 4
      %s36 = int_to_ptr.vmem [resolvable:$true] %s35
      %41 = dma.hbm_to_vmem [thread:$0]  %s2, 4096, %s36, [#allocation3], 512, 512, 32
    $region13: #{tpu_custom_call.1} parent=1 // pred_fallthru
      _
    // Predicated region
    $region14: #{tpu_custom_call.1} parent=1 // pred_check
      _
    $region15: #{tpu_custom_call.1} parent=1 // pred_check_branch
      %43 = sbr.rel (0) target = $region17
    $region16: #{tpu_custom_call.1} parent=1 // pred_region
      %44 = dma.done [#allocation5], 64
    $region17: #{tpu_custom_call.1} parent=1 // pred_fallthru
      _
    // Predicated region
    $region18: #{tpu_custom_call.1} parent=1 // pred_check
      _
    $region19: #{tpu_custom_call.1} parent=1 // pred_check_branch
      %46 = sbr.rel (0) target = $region21
    $region20: #{tpu_custom_call.1} parent=1 // pred_region
      %47 = dma.done [#allocation6], 16
    $region21: #{tpu_custom_call.1} parent=1 // pred_fallthru
      _
    // Predicated region
    $region22: #{tpu_custom_call.1} parent=1 // pred_check
      _
    $region23: #{tpu_custom_call.1} parent=1 // pred_check_branch
      %49 = sbr.rel (0) target = $region25
    $region24: #{tpu_custom_call.1} parent=1 // pred_region
      %50 = dma.done [#allocation3], 4096
    $region25: #{tpu_custom_call.1} parent=1 // pred_fallthru
      _
    %51 = sfence
    %v52 = vld [vmem:[#allocation8] sm:$0xff]
    %v53 = vld [vmem:[#allocation8 + $0x8] sm:$0xff]
    %v54 = vld [vmem:[#allocation8 + $0x10] sm:$0xff]
    %v55 = vld [vmem:[#allocation8 + $0x18] sm:$0xff]
    %v56 = vld [vmem:[#allocation8 + $0x80] sm:$0xff]
    %v57 = vld [vmem:[#allocation8 + $0x88] sm:$0xff]
    %v58 = vld [vmem:[#allocation8 + $0x90] sm:$0xff]
    %v59 = vld [vmem:[#allocation8 + $0x98] sm:$0xff]
    %s60 = scalar_lea.vmem [#allocation8], 32
    %v61 = vld [vmem:[%s60] sm:$0xff]
    %v62 = vld [vmem:[%s60 + $0x8] sm:$0xff]
    %v63 = vld [vmem:[%s60 + $0x10] sm:$0xff]
    %v64 = vld [vmem:[%s60 + $0x18] sm:$0xff]
    %v65 = vld [vmem:[%s60 + $0x80] sm:$0xff]
    %v66 = vld [vmem:[%s60 + $0x88] sm:$0xff]
    %v67 = vld [vmem:[%s60 + $0x90] sm:$0xff]
    %v68 = vld [vmem:[%s60 + $0x98] sm:$0xff]
    %s69 = scalar_lea.vmem [#allocation8], 64
    %v70 = vld [vmem:[%s69] sm:$0xff]
    %v71 = vld [vmem:[%s69 + $0x8] sm:$0xff]
    %v72 = vld [vmem:[%s69 + $0x10] sm:$0xff]
    %v73 = vld [vmem:[%s69 + $0x18] sm:$0xff]
    %v74 = vld [vmem:[%s69 + $0x80] sm:$0xff]
    %v75 = vld [vmem:[%s69 + $0x88] sm:$0xff]
    %v76 = vld [vmem:[%s69 + $0x90] sm:$0xff]
    %v77 = vld [vmem:[%s69 + $0x98] sm:$0xff]
    %s78 = scalar_lea.vmem [#allocation8], 96
    %v79 = vld [vmem:[%s78] sm:$0xff]
    %v80 = vld [vmem:[%s78 + $0x8] sm:$0xff]
    %v81 = vld [vmem:[%s78 + $0x10] sm:$0xff]
    %v82 = vld [vmem:[%s78 + $0x18] sm:$0xff]
    %v83 = vld [vmem:[%s78 + $0x80] sm:$0xff]
    %v84 = vld [vmem:[%s78 + $0x88] sm:$0xff]
    %v85 = vld [vmem:[%s78 + $0x90] sm:$0xff]
    %v86 = vld [vmem:[%s78 + $0x98] sm:$0xff]
    %s87 = sld [smem:[#allocation2]]
    %v88 = vstv %s87
    %v89 = vmul.f32 %v52, %v88
    %v90 = vmul.f32 %v53, %v88
    %v91 = vmul.f32 %v54, %v88
    %v92 = vmul.f32 %v55, %v88
    %v93 = vmul.f32 %v56, %v88
    %v94 = vmul.f32 %v57, %v88
    %v95 = vmul.f32 %v58, %v88
    %v96 = vmul.f32 %v59, %v88
    %s97 = sld [smem:[#allocation2 + $0x1]]
    %v98 = vstv %s97
    %v99 = vmul.f32 %v61, %v98
    %v100 = vmul.f32 %v62, %v98
    %v101 = vmul.f32 %v63, %v98
    %v102 = vmul.f32 %v64, %v98
    %v103 = vmul.f32 %v65, %v98
    %v104 = vmul.f32 %v66, %v98
    %v105 = vmul.f32 %v67, %v98
    %v106 = vmul.f32 %v68, %v98
    %v107 = vadd.f32 %v89, %v99
    %v108 = vadd.f32 %v90, %v100
    %v109 = vadd.f32 %v91, %v101
    %v110 = vadd.f32 %v92, %v102
    %v111 = vadd.f32 %v93, %v103
    %v112 = vadd.f32 %v94, %v104
    %v113 = vadd.f32 %v95, %v105
    %v114 = vadd.f32 %v96, %v106
    %s115 = sld [smem:[#allocation2 + $0x2]]
    %v116 = vstv %s115
    %v117 = vmul.f32 %v70, %v116
    %v118 = vmul.f32 %v71, %v116
    %v119 = vmul.f32 %v72, %v116
    %v120 = vmul.f32 %v73, %v116
    %v121 = vmul.f32 %v74, %v116
    %v122 = vmul.f32 %v75, %v116
    %v123 = vmul.f32 %v76, %v116
    %v124 = vmul.f32 %v77, %v116
    %v125 = vadd.f32 %v107, %v117
    %v126 = vadd.f32 %v108, %v118
    %v127 = vadd.f32 %v109, %v119
    %v128 = vadd.f32 %v110, %v120
    %v129 = vadd.f32 %v111, %v121
    %v130 = vadd.f32 %v112, %v122
    %v131 = vadd.f32 %v113, %v123
    %v132 = vadd.f32 %v114, %v124
    %s133 = sld [smem:[#allocation2 + $0x3]]
    %v134 = vstv %s133
    %v135 = vmul.f32 %v79, %v134
    %v136 = vmul.f32 %v80, %v134
    %v137 = vmul.f32 %v81, %v134
    %v138 = vmul.f32 %v82, %v134
    %v139 = vmul.f32 %v83, %v134
    %v140 = vmul.f32 %v84, %v134
    %v141 = vmul.f32 %v85, %v134
    %v142 = vmul.f32 %v86, %v134
    %v143 = vadd.f32 %v125, %v135
    %v144 = vadd.f32 %v126, %v136
    %v145 = vadd.f32 %v127, %v137
    %v146 = vadd.f32 %v128, %v138
    %v147 = vadd.f32 %v129, %v139
    %v148 = vadd.f32 %v130, %v140
    %v149 = vadd.f32 %v131, %v141
    %v150 = vadd.f32 %v132, %v142
    %s151 = sld [smem:[#allocation7]]
    %v152 = vstv %s151
    %v153 = vadd.f32 %v143, %v152
    %v154 = vadd.f32 %v144, %v152
    %v155 = vadd.f32 %v145, %v152
    %v156 = vadd.f32 %v146, %v152
    %v157 = vadd.f32 %v147, %v152
    %v158 = vadd.f32 %v148, %v152
    %v159 = vadd.f32 %v149, %v152
    %v160 = vadd.f32 %v150, %v152
    %s161 = sld [smem:[#allocation2 + $0x80]]
    %v162 = vstv %s161
    %v163 = vmul.f32 %v52, %v162
    %v164 = vmul.f32 %v53, %v162
    %v165 = vmul.f32 %v54, %v162
    %v166 = vmul.f32 %v55, %v162
    %v167 = vmul.f32 %v56, %v162
    %v168 = vmul.f32 %v57, %v162
    %v169 = vmul.f32 %v58, %v162
    %v170 = vmul.f32 %v59, %v162
    %s171 = sld [smem:[#allocation2 + $0x81]]
    %v172 = vstv %s171
    %v173 = vmul.f32 %v61, %v172
    %v174 = vmul.f32 %v62, %v172
    %v175 = vmul.f32 %v63, %v172
    %v176 = vmul.f32 %v64, %v172
    %v177 = vmul.f32 %v65, %v172
    %v178 = vmul.f32 %v66, %v172
    %v179 = vmul.f32 %v67, %v172
    %v180 = vmul.f32 %v68, %v172
    %v181 = vadd.f32 %v163, %v173
    %v182 = vadd.f32 %v164, %v174
    %v183 = vadd.f32 %v165, %v175
    %v184 = vadd.f32 %v166, %v176
    %v185 = vadd.f32 %v167, %v177
    %v186 = vadd.f32 %v168, %v178
    %v187 = vadd.f32 %v169, %v179
    %v188 = vadd.f32 %v170, %v180
    %s189 = sld [smem:[#allocation2 + $0x82]]
    %v190 = vstv %s189
    %v191 = vmul.f32 %v70, %v190
    %v192 = vmul.f32 %v71, %v190
    %v193 = vmul.f32 %v72, %v190
    %v194 = vmul.f32 %v73, %v190
    %v195 = vmul.f32 %v74, %v190
    %v196 = vmul.f32 %v75, %v190
    %v197 = vmul.f32 %v76, %v190
    %v198 = vmul.f32 %v77, %v190
    %v199 = vadd.f32 %v181, %v191
    %v200 = vadd.f32 %v182, %v192
    %v201 = vadd.f32 %v183, %v193
    %v202 = vadd.f32 %v184, %v194
    %v203 = vadd.f32 %v185, %v195
    %v204 = vadd.f32 %v186, %v196
    %v205 = vadd.f32 %v187, %v197
    %v206 = vadd.f32 %v188, %v198
    %s207 = sld [smem:[#allocation2 + $0x83]]
    %v208 = vstv %s207
    %v209 = vmul.f32 %v79, %v208
    %v210 = vmul.f32 %v80, %v208
    %v211 = vmul.f32 %v81, %v208
    %v212 = vmul.f32 %v82, %v208
    %v213 = vmul.f32 %v83, %v208
    %v214 = vmul.f32 %v84, %v208
    %v215 = vmul.f32 %v85, %v208
    %v216 = vmul.f32 %v86, %v208
    %v217 = vadd.f32 %v199, %v209
    %v218 = vadd.f32 %v200, %v210
    %v219 = vadd.f32 %v201, %v211
    %v220 = vadd.f32 %v202, %v212
    %v221 = vadd.f32 %v203, %v213
    %v222 = vadd.f32 %v204, %v214
    %v223 = vadd.f32 %v205, %v215
    %v224 = vadd.f32 %v206, %v216
    %s225 = sld [smem:[#allocation7 + $0x1]]
    %v226 = vstv %s225
    %v227 = vadd.f32 %v217, %v226
    %v228 = vadd.f32 %v218, %v226
    %v229 = vadd.f32 %v219, %v226
    %v230 = vadd.f32 %v220, %v226
    %v231 = vadd.f32 %v221, %v226
    %v232 = vadd.f32 %v222, %v226
    %v233 = vadd.f32 %v223, %v226
    %v234 = vadd.f32 %v224, %v226
    %s235 = sld [smem:[#allocation2 + $0x100]]
    %v236 = vstv %s235
    %v237 = vmul.f32 %v52, %v236
    %v238 = vmul.f32 %v53, %v236
    %v239 = vmul.f32 %v54, %v236
    %v240 = vmul.f32 %v55, %v236
    %v241 = vmul.f32 %v56, %v236
    %v242 = vmul.f32 %v57, %v236
    %v243 = vmul.f32 %v58, %v236
    %v244 = vmul.f32 %v59, %v236
    %s245 = sld [smem:[#allocation2 + $0x101]]
    %v246 = vstv %s245
    %v247 = vmul.f32 %v61, %v246
    %v248 = vmul.f32 %v62, %v246
    %v249 = vmul.f32 %v63, %v246
    %v250 = vmul.f32 %v64, %v246
    %v251 = vmul.f32 %v65, %v246
    %v252 = vmul.f32 %v66, %v246
    %v253 = vmul.f32 %v67, %v246
    %v254 = vmul.f32 %v68, %v246
    %v255 = vadd.f32 %v237, %v247
    %v256 = vadd.f32 %v238, %v248
    %v257 = vadd.f32 %v239, %v249
    %v258 = vadd.f32 %v240, %v250
    %v259 = vadd.f32 %v241, %v251
    %v260 = vadd.f32 %v242, %v252
    %v261 = vadd.f32 %v243, %v253
    %v262 = vadd.f32 %v244, %v254
    %s263 = sld [smem:[#allocation2 + $0x102]]
    %v264 = vstv %s263
    %v265 = vmul.f32 %v70, %v264
    %v266 = vmul.f32 %v71, %v264
    %v267 = vmul.f32 %v72, %v264
    %v268 = vmul.f32 %v73, %v264
    %v269 = vmul.f32 %v74, %v264
    %v270 = vmul.f32 %v75, %v264
    %v271 = vmul.f32 %v76, %v264
    %v272 = vmul.f32 %v77, %v264
    %v273 = vadd.f32 %v255, %v265
    %v274 = vadd.f32 %v256, %v266
    %v275 = vadd.f32 %v257, %v267
    %v276 = vadd.f32 %v258, %v268
    %v277 = vadd.f32 %v259, %v269
    %v278 = vadd.f32 %v260, %v270
    %v279 = vadd.f32 %v261, %v271
    %v280 = vadd.f32 %v262, %v272
    %s281 = sld [smem:[#allocation2 + $0x103]]
    %v282 = vstv %s281
    %v283 = vmul.f32 %v79, %v282
    %v284 = vmul.f32 %v80, %v282
    %v285 = vmul.f32 %v81, %v282
    %v286 = vmul.f32 %v82, %v282
    %v287 = vmul.f32 %v83, %v282
    %v288 = vmul.f32 %v84, %v282
    %v289 = vmul.f32 %v85, %v282
    %v290 = vmul.f32 %v86, %v282
    %v291 = vadd.f32 %v273, %v283
    %v292 = vadd.f32 %v274, %v284
    %v293 = vadd.f32 %v275, %v285
    %v294 = vadd.f32 %v276, %v286
    %v295 = vadd.f32 %v277, %v287
    %v296 = vadd.f32 %v278, %v288
    %v297 = vadd.f32 %v279, %v289
    %v298 = vadd.f32 %v280, %v290
    %s299 = sld [smem:[#allocation7 + $0x2]]
    %v300 = vstv %s299
    %v301 = vadd.f32 %v291, %v300
    %v302 = vadd.f32 %v292, %v300
    %v303 = vadd.f32 %v293, %v300
    %v304 = vadd.f32 %v294, %v300
    %v305 = vadd.f32 %v295, %v300
    %v306 = vadd.f32 %v296, %v300
    %v307 = vadd.f32 %v297, %v300
    %v308 = vadd.f32 %v298, %v300
    %s309 = sld [smem:[#allocation2 + $0x180]]
    %v310 = vstv %s309
    %v311 = vmul.f32 %v52, %v310
    %v312 = vmul.f32 %v53, %v310
    %v313 = vmul.f32 %v54, %v310
    %v314 = vmul.f32 %v55, %v310
    %v315 = vmul.f32 %v56, %v310
    %v316 = vmul.f32 %v57, %v310
    %v317 = vmul.f32 %v58, %v310
    %v318 = vmul.f32 %v59, %v310
    %s319 = sld [smem:[#allocation2 + $0x181]]
    %v320 = vstv %s319
    %v321 = vmul.f32 %v61, %v320
    %v322 = vmul.f32 %v62, %v320
    %v323 = vmul.f32 %v63, %v320
    %v324 = vmul.f32 %v64, %v320
    %v325 = vmul.f32 %v65, %v320
    %v326 = vmul.f32 %v66, %v320
    %v327 = vmul.f32 %v67, %v320
    %v328 = vmul.f32 %v68, %v320
    %v329 = vadd.f32 %v311, %v321
    %v330 = vadd.f32 %v312, %v322
    %v331 = vadd.f32 %v313, %v323
    %v332 = vadd.f32 %v314, %v324
    %v333 = vadd.f32 %v315, %v325
    %v334 = vadd.f32 %v316, %v326
    %v335 = vadd.f32 %v317, %v327
    %v336 = vadd.f32 %v318, %v328
    %s337 = sld [smem:[#allocation2 + $0x182]]
    %v338 = vstv %s337
    %v339 = vmul.f32 %v70, %v338
    %v340 = vmul.f32 %v71, %v338
    %v341 = vmul.f32 %v72, %v338
    %v342 = vmul.f32 %v73, %v338
    %v343 = vmul.f32 %v74, %v338
    %v344 = vmul.f32 %v75, %v338
    %v345 = vmul.f32 %v76, %v338
    %v346 = vmul.f32 %v77, %v338
    %v347 = vadd.f32 %v329, %v339
    %v348 = vadd.f32 %v330, %v340
    %v349 = vadd.f32 %v331, %v341
    %v350 = vadd.f32 %v332, %v342
    %v351 = vadd.f32 %v333, %v343
    %v352 = vadd.f32 %v334, %v344
    %v353 = vadd.f32 %v335, %v345
    %v354 = vadd.f32 %v336, %v346
    %s355 = sld [smem:[#allocation2 + $0x183]]
    %v356 = vstv %s355
    %v357 = vmul.f32 %v79, %v356
    %v358 = vmul.f32 %v80, %v356
    %v359 = vmul.f32 %v81, %v356
    %v360 = vmul.f32 %v82, %v356
    %v361 = vmul.f32 %v83, %v356
    %v362 = vmul.f32 %v84, %v356
    %v363 = vmul.f32 %v85, %v356
    %v364 = vmul.f32 %v86, %v356
    %v365 = vadd.f32 %v347, %v357
    %v366 = vadd.f32 %v348, %v358
    %v367 = vadd.f32 %v349, %v359
    %v368 = vadd.f32 %v350, %v360
    %v369 = vadd.f32 %v351, %v361
    %v370 = vadd.f32 %v352, %v362
    %v371 = vadd.f32 %v353, %v363
    %v372 = vadd.f32 %v354, %v364
    %s373 = sld [smem:[#allocation7 + $0x3]]
    %v374 = vstv %s373
    %v375 = vadd.f32 %v365, %v374
    %v376 = vadd.f32 %v366, %v374
    %v377 = vadd.f32 %v367, %v374
    %v378 = vadd.f32 %v368, %v374
    %v379 = vadd.f32 %v369, %v374
    %v380 = vadd.f32 %v370, %v374
    %v381 = vadd.f32 %v371, %v374
    %v382 = vadd.f32 %v372, %v374
    %v383 = vmax.f32 %v153, %v227
    %v384 = vmax.f32 %v154, %v228
    %v385 = vmax.f32 %v155, %v229
    %v386 = vmax.f32 %v156, %v230
    %v387 = vmax.f32 %v157, %v231
    %v388 = vmax.f32 %v158, %v232
    %v389 = vmax.f32 %v159, %v233
    %v390 = vmax.f32 %v160, %v234
    %v391 = vmax.f32 %v383, %v301
    %v392 = vmax.f32 %v384, %v302
    %v393 = vmax.f32 %v385, %v303
    %v394 = vmax.f32 %v386, %v304
    %v395 = vmax.f32 %v387, %v305
    %v396 = vmax.f32 %v388, %v306
    %v397 = vmax.f32 %v389, %v307
    %v398 = vmax.f32 %v390, %v308
    %v399 = vmax.f32 %v391, %v375
    %v400 = vmax.f32 %v392, %v376
    %v401 = vmax.f32 %v393, %v377
    %v402 = vmax.f32 %v394, %v378
    %v403 = vmax.f32 %v395, %v379
    %v404 = vmax.f32 %v396, %v380
    %v405 = vmax.f32 %v397, %v381
    %v406 = vmax.f32 %v398, %v382
    %v407 = vsub.f32 %v153, %v399
    %v408 = vsub.f32 %v154, %v400
    %v409 = vsub.f32 %v155, %v401
    %v410 = vsub.f32 %v156, %v402
    %v411 = vsub.f32 %v157, %v403
    %v412 = vsub.f32 %v158, %v404
    %v413 = vsub.f32 %v159, %v405
    %v414 = vsub.f32 %v160, %v406
    %v415 = vmul.f32 %v407, 1.442695
    %v416 = vpow.pop %v415
    %v417 = vmul.f32 %v408, 1.442695
    %v418 = vpow.pop %v417
    %v419 = vmul.f32 %v409, 1.442695
    %v420 = vpow.pop %v419
    %v421 = vmul.f32 %v410, 1.442695
    %v422 = vpow.pop %v421
    %v423 = vmul.f32 %v411, 1.442695
    %v424 = vpow.pop %v423
    %v425 = vmul.f32 %v412, 1.442695
    %v426 = vpow.pop %v425
    %v427 = vmul.f32 %v413, 1.442695
    %v428 = vpow.pop %v427
    %v429 = vmul.f32 %v414, 1.442695
    %v430 = vpow.pop %v429
    %v431 = vsub.f32 %v227, %v399
    %v432 = vsub.f32 %v228, %v400
    %v433 = vsub.f32 %v229, %v401
    %v434 = vsub.f32 %v230, %v402
    %v435 = vsub.f32 %v231, %v403
    %v436 = vsub.f32 %v232, %v404
    %v437 = vsub.f32 %v233, %v405
    %v438 = vsub.f32 %v234, %v406
    %v439 = vmul.f32 %v431, 1.442695
    %v440 = vpow.pop %v439
    %v441 = vmul.f32 %v432, 1.442695
    %v442 = vpow.pop %v441
    %v443 = vmul.f32 %v433, 1.442695
    %v444 = vpow.pop %v443
    %v445 = vmul.f32 %v434, 1.442695
    %v446 = vpow.pop %v445
    %v447 = vmul.f32 %v435, 1.442695
    %v448 = vpow.pop %v447
    %v449 = vmul.f32 %v436, 1.442695
    %v450 = vpow.pop %v449
    %v451 = vmul.f32 %v437, 1.442695
    %v452 = vpow.pop %v451
    %v453 = vmul.f32 %v438, 1.442695
    %v454 = vpow.pop %v453
    %v455 = vsub.f32 %v301, %v399
    %v456 = vsub.f32 %v302, %v400
    %v457 = vsub.f32 %v303, %v401
    %v458 = vsub.f32 %v304, %v402
    %v459 = vsub.f32 %v305, %v403
    %v460 = vsub.f32 %v306, %v404
    %v461 = vsub.f32 %v307, %v405
    %v462 = vsub.f32 %v308, %v406
    %v463 = vmul.f32 %v455, 1.442695
    %v464 = vpow.pop %v463
    %v465 = vmul.f32 %v456, 1.442695
    %v466 = vpow.pop %v465
    %v467 = vmul.f32 %v457, 1.442695
    %v468 = vpow.pop %v467
    %v469 = vmul.f32 %v458, 1.442695
    %v470 = vpow.pop %v469
    %v471 = vmul.f32 %v459, 1.442695
    %v472 = vpow.pop %v471
    %v473 = vmul.f32 %v460, 1.442695
    %v474 = vpow.pop %v473
    %v475 = vmul.f32 %v461, 1.442695
    %v476 = vpow.pop %v475
    %v477 = vmul.f32 %v462, 1.442695
    %v478 = vpow.pop %v477
    %v479 = vsub.f32 %v375, %v399
    %v480 = vsub.f32 %v376, %v400
    %v481 = vsub.f32 %v377, %v401
    %v482 = vsub.f32 %v378, %v402
    %v483 = vsub.f32 %v379, %v403
    %v484 = vsub.f32 %v380, %v404
    %v485 = vsub.f32 %v381, %v405
    %v486 = vsub.f32 %v382, %v406
    %v487 = vmul.f32 %v479, 1.442695
    %v488 = vpow.pop %v487
    %v489 = vmul.f32 %v480, 1.442695
    %v490 = vpow.pop %v489
    %v491 = vmul.f32 %v481, 1.442695
    %v492 = vpow.pop %v491
    %v493 = vmul.f32 %v482, 1.442695
    %v494 = vpow.pop %v493
    %v495 = vmul.f32 %v483, 1.442695
    %v496 = vpow.pop %v495
    %v497 = vmul.f32 %v484, 1.442695
    %v498 = vpow.pop %v497
    %v499 = vmul.f32 %v485, 1.442695
    %v500 = vpow.pop %v499
    %v501 = vmul.f32 %v486, 1.442695
    %v502 = vpow.pop %v501
    %v503 = vadd.f32 %v416, %v440
    %v504 = vadd.f32 %v418, %v442
    %v505 = vadd.f32 %v420, %v444
    %v506 = vadd.f32 %v422, %v446
    %v507 = vadd.f32 %v424, %v448
    %v508 = vadd.f32 %v426, %v450
    %v509 = vadd.f32 %v428, %v452
    %v510 = vadd.f32 %v430, %v454
    %v511 = vadd.f32 %v503, %v464
    %v512 = vadd.f32 %v504, %v466
    %v513 = vadd.f32 %v505, %v468
    %v514 = vadd.f32 %v506, %v470
    %v515 = vadd.f32 %v507, %v472
    %v516 = vadd.f32 %v508, %v474
    %v517 = vadd.f32 %v509, %v476
    %v518 = vadd.f32 %v510, %v478
    %v519 = vadd.f32 %v511, %v488
    %v520 = vadd.f32 %v512, %v490
    %v521 = vadd.f32 %v513, %v492
    %v522 = vadd.f32 %v514, %v494
    %v523 = vadd.f32 %v515, %v496
    %v524 = vadd.f32 %v516, %v498
    %v525 = vadd.f32 %v517, %v500
    %v526 = vadd.f32 %v518, %v502
    %v527 = vrcp.pop %v519
    %v528 = vrcp.pop %v520
    %v529 = vrcp.pop %v521
    %v530 = vrcp.pop %v522
    %v531 = vrcp.pop %v523
    %v532 = vrcp.pop %v524
    %v533 = vrcp.pop %v525
    %v534 = vrcp.pop %v526
    %v535 = vmul.f32 %v416, %v527
    %v536 = vmul.f32 %v418, %v528
    %v537 = vmul.f32 %v420, %v529
    %v538 = vmul.f32 %v422, %v530
    %v539 = vmul.f32 %v424, %v531
    %v540 = vmul.f32 %v426, %v532
    %v541 = vmul.f32 %v428, %v533
    %v542 = vmul.f32 %v430, %v534
    %543 = vst [vmem:[#allocation9] sm:$0xff] %v535
    %544 = vst [vmem:[#allocation9 + $0x8] sm:$0xff] %v536
    %545 = vst [vmem:[#allocation9 + $0x10] sm:$0xff] %v537
    %546 = vst [vmem:[#allocation9 + $0x18] sm:$0xff] %v538
    %547 = vst [vmem:[#allocation9 + $0x80] sm:$0xff] %v539
    %548 = vst [vmem:[#allocation9 + $0x88] sm:$0xff] %v540
    %549 = vst [vmem:[#allocation9 + $0x90] sm:$0xff] %v541
    %550 = vst [vmem:[#allocation9 + $0x98] sm:$0xff] %v542
    %v551 = vmul.f32 %v440, %v527
    %v552 = vmul.f32 %v442, %v528
    %v553 = vmul.f32 %v444, %v529
    %v554 = vmul.f32 %v446, %v530
    %v555 = vmul.f32 %v448, %v531
    %v556 = vmul.f32 %v450, %v532
    %v557 = vmul.f32 %v452, %v533
    %v558 = vmul.f32 %v454, %v534
    %s559 = scalar_lea.vmem [#allocation9], 32
    %560 = vst [vmem:[%s559] sm:$0xff] %v551
    %561 = vst [vmem:[%s559 + $0x8] sm:$0xff] %v552
    %562 = vst [vmem:[%s559 + $0x10] sm:$0xff] %v553
    %563 = vst [vmem:[%s559 + $0x18] sm:$0xff] %v554
    %564 = vst [vmem:[%s559 + $0x80] sm:$0xff] %v555
    %565 = vst [vmem:[%s559 + $0x88] sm:$0xff] %v556
    %566 = vst [vmem:[%s559 + $0x90] sm:$0xff] %v557
    %567 = vst [vmem:[%s559 + $0x98] sm:$0xff] %v558
    %v568 = vmul.f32 %v464, %v527
    %v569 = vmul.f32 %v466, %v528
    %v570 = vmul.f32 %v468, %v529
    %v571 = vmul.f32 %v470, %v530
    %v572 = vmul.f32 %v472, %v531
    %v573 = vmul.f32 %v474, %v532
    %v574 = vmul.f32 %v476, %v533
    %v575 = vmul.f32 %v478, %v534
    %s576 = scalar_lea.vmem [#allocation9], 64
    %577 = vst [vmem:[%s576] sm:$0xff] %v568
    %578 = vst [vmem:[%s576 + $0x8] sm:$0xff] %v569
    %579 = vst [vmem:[%s576 + $0x10] sm:$0xff] %v570
    %580 = vst [vmem:[%s576 + $0x18] sm:$0xff] %v571
    %581 = vst [vmem:[%s576 + $0x80] sm:$0xff] %v572
    %582 = vst [vmem:[%s576 + $0x88] sm:$0xff] %v573
    %583 = vst [vmem:[%s576 + $0x90] sm:$0xff] %v574
    %584 = vst [vmem:[%s576 + $0x98] sm:$0xff] %v575
    %v585 = vmul.f32 %v488, %v527
    %v586 = vmul.f32 %v490, %v528
    %v587 = vmul.f32 %v492, %v529
    %v588 = vmul.f32 %v494, %v530
    %v589 = vmul.f32 %v496, %v531
    %v590 = vmul.f32 %v498, %v532
    %v591 = vmul.f32 %v500, %v533
    %v592 = vmul.f32 %v502, %v534
    %s593 = scalar_lea.vmem [#allocation9], 96
    %594 = vst [vmem:[%s593] sm:$0xff] %v585
    %595 = vst [vmem:[%s593 + $0x8] sm:$0xff] %v586
    %596 = vst [vmem:[%s593 + $0x10] sm:$0xff] %v587
    %597 = vst [vmem:[%s593 + $0x18] sm:$0xff] %v588
    %598 = vst [vmem:[%s593 + $0x80] sm:$0xff] %v589
    %599 = vst [vmem:[%s593 + $0x88] sm:$0xff] %v590
    %600 = vst [vmem:[%s593 + $0x90] sm:$0xff] %v591
    %601 = vst [vmem:[%s593 + $0x98] sm:$0xff] %v592
    // Predicated region
    $region26: #{tpu_custom_call.1} parent=1 // pred_check
      _
    $region27: #{tpu_custom_call.1} parent=1 // pred_check_branch
      %603 = sbr.rel (0) target = $region29
    $region28: #{tpu_custom_call.1} parent=1 // pred_region
      %s605 = ssub.s32 4096, 4096
      %606 = vsyncadd [#allocation4], %s605
      %s607 = sshll.u32 [#allocation9], 4
      %s608 = int_to_ptr.vmem [resolvable:$true] %s607
      %613 = dma.vmem_to_hbm [thread:$0]  %s608, 4096, %s3, [#allocation4], 512, 512, 32
    $region29: #{tpu_custom_call.1} parent=1 // pred_fallthru
      _
    // Predicated region
    $region30: #{tpu_custom_call.1} parent=1 // pred_check
      _
    $region31: #{tpu_custom_call.1} parent=1 // pred_check_branch
      %615 = sbr.rel (0) target = $region33
    $region32: #{tpu_custom_call.1} parent=1 // pred_region
      %616 = dma.done [#allocation4], 4096
    $region33: #{tpu_custom_call.1} parent=1 // pred_fallthru
      _
    %617 = vsyncpa [#allocation3], 1
    %618 = vsyncpa [#allocation4], 1
    %619 = vsyncpa [#allocation5], 1
    %620 = vsyncpa [#allocation6], 1

</llo_original>
